<compile_context>
chip_gen: v5e
topology: v5e:2x2
jax: 0.10.0
libtpu: 0.0.40
codegen_flags: <defaults>
</compile_context>

<pallas_src>
import jax
import jax.numpy as jnp
from jax.experimental import pallas as pl
from jax.experimental.pallas import tpu as pltpu

NUM_LABELS = 6
IN_FEATURES = 12
OUT_PAD = 8            # logits padded 6 -> 8; last dim == full array extent
MAX_BATCH_BLOCK = 2048

# Logical (PyTorch) layer dims and padded storage shapes [in, out].
_LOGICAL_DIMS = [(IN_FEATURES, 128), (128, 256), (256, 512),
                 (512, 128), (128, 64), (64, NUM_LABELS)]
_LAYER_SHAPES = [(IN_FEATURES, 128), (128, 256), (256, 512),
                 (512, 128), (128, 128), (128, OUT_PAD)]


def _mlp_kernel(x_ref,
                w1_ref, b1_ref, w2_ref, b2_ref, w3_ref, b3_ref,
                w4_ref, b4_ref, w5_ref, b5_ref, w6_ref, b6_ref,
                o_ref):
    """Fused 6-layer MLP forward for one batch tile. Weights resident in VMEM."""

    def hidden(h_bf16, w_ref, b_ref):
        # bf16 x bf16 -> f32 accumulation on the MXU.
        acc = jnp.dot(h_bf16, w_ref[...], preferred_element_type=jnp.float32)
        # bf16 epilogue: bias add + ReLU in bf16, fed straight into next dot.
        h = acc.astype(jnp.bfloat16) + b_ref[...]
        return jnp.maximum(h, 0)

    # Dropout layers are identity in eval/inference mode.
    h = x_ref[...].astype(jnp.bfloat16)      # (TB, 12)
    h = hidden(h, w1_ref, b1_ref)            # (TB, 128)
    h = hidden(h, w2_ref, b2_ref)            # (TB, 256)
    h = hidden(h, w3_ref, b3_ref)            # (TB, 512)
    h = hidden(h, w4_ref, b4_ref)            # (TB, 128)
    h = hidden(h, w5_ref, b5_ref)            # (TB, 128) (cols 64: are zero)
    acc = jnp.dot(h, w6_ref[...], preferred_element_type=jnp.float32)
    o_ref[...] = (acc + b6_ref[...].astype(jnp.float32)).astype(o_ref.dtype)


def _pick_batch_tile(B):
    """Batch tile: full extent for tiny B, else multiple of 8 giving >=2 grid
    steps (v7x megacore) and capped at MAX_BATCH_BLOCK."""
    if B < 16:
        return B                      # full-extent block (exempt from 8-row rule)
    tb = (B + 1) // 2                 # aim for 2 grid steps
    tb = ((tb + 7) // 8) * 8          # round up to a multiple of 8
    return min(tb, MAX_BATCH_BLOCK)


@jax.jit
def video_audio_forward(x, params):
    """x: (B, 12) float32. params: dict of bf16 padded weights/biases. -> (B, 6)."""
    B = x.shape[0]
    tb = _pick_batch_tile(B)
    grid = (pl.cdiv(B, tb),)

    operands = [x]
    in_specs = [pl.BlockSpec((tb, IN_FEATURES), lambda i: (i, 0))]
    for li in range(1, 7):
        w = params[f"w{li}"]
        b = params[f"b{li}"]
        operands += [w, b]
        # Constant block index -> weights/biases stay resident in VMEM across
        # batch grid steps (no re-fetch).
        in_specs += [pl.BlockSpec(w.shape, lambda i: (0, 0)),
                     pl.BlockSpec(b.shape, lambda i: (0, 0))]

    # Advisory cost hint (actual dtypes / padded output) for XLA scheduling.
    w_elems = sum(fi * fo for fi, fo in _LAYER_SHAPES)
    b_elems = sum(fo for _, fo in _LAYER_SHAPES)
    cost = pl.CostEstimate(
        flops=2 * B * w_elems,
        transcendentals=0,
        bytes_accessed=2 * (w_elems + b_elems)           # bf16 weights/biases
        + 4 * B * IN_FEATURES                            # f32 input
        + 4 * B * OUT_PAD,                               # f32 padded output
    )

    out_p = pl.pallas_call(
        _mlp_kernel,
        out_shape=jax.ShapeDtypeStruct((B, OUT_PAD), jnp.float32),
        grid=grid,
        in_specs=in_specs,
        out_specs=pl.BlockSpec((tb, OUT_PAD), lambda i: (i, 0)),
        compiler_params=pltpu.CompilerParams(
            dimension_semantics=("parallel",)),
        cost_estimate=cost,
    )(*operands)

    return out_p[:, :NUM_LABELS]


def init_params(key):
    """Deterministic synthetic params matching nn.Linear fan-in init.

    Weights stored [in_features, out_features] (transposed vs. PyTorch),
    bfloat16, zero-padded to _LAYER_SHAPES (layer-5 out 64->128, layer-6
    (64,6)->(128,8)); padded rows/cols are zero so results match logical dims.
    """
    params = {}
    keys = jax.random.split(key, 2 * len(_LOGICAL_DIMS))
    for i, ((fin, fout), (sin, sout)) in enumerate(zip(_LOGICAL_DIMS, _LAYER_SHAPES)):
        wk, bk = keys[2 * i], keys[2 * i + 1]
        bound = 1.0 / float(fin) ** 0.5   # PyTorch default uniform init bound
        w = jax.random.uniform(wk, (fin, fout), jnp.float32, -bound, bound)
        b = jax.random.uniform(bk, (fout,), jnp.float32, -bound, bound)
        w_p = jnp.zeros((sin, sout), jnp.float32).at[:fin, :fout].set(w)
        b_p = jnp.zeros((1, sout), jnp.float32).at[0, :fout].set(b)
        params[f"w{i + 1}"] = w_p.astype(jnp.bfloat16)
        params[f"b{i + 1}"] = b_p.astype(jnp.bfloat16)
    return params


def _reference_forward(x, params):
    """Plain-JAX reference using the same bf16-matmul / f32-accum / bf16-epilogue math."""
    h = x.astype(jnp.bfloat16)
    for i in range(1, 6):
        acc = jnp.dot(h, params[f"w{i}"], preferred_element_type=jnp.float32)
        h = jnp.maximum(acc.astype(jnp.bfloat16) + params[f"b{i}"], 0)
    acc = jnp.dot(h, params["w6"], preferred_element_type=jnp.float32)
    out = acc + params["b6"].astype(jnp.float32)
    return out[:, :NUM_LABELS]


if __name__ == "__main__":
    key = jax.random.PRNGKey(0)
    pkey, xkey = jax.random.split(key)

    params = init_params(pkey)

    # Small single-tile case and a multi-grid-step case (exercises index maps).
    for batch in (4, 32):
        x = jax.random.normal(jax.random.fold_in(xkey, batch),
                              (batch, IN_FEATURES), jnp.float32)
        out = jax.block_until_ready(video_audio_forward(x, params))
        ref = _reference_forward(x, params)
        assert out.shape == (batch, NUM_LABELS)
        assert jnp.allclose(out, ref, atol=2e-2, rtol=2e-2), "mismatch vs reference"

    print("KERNEL_OK")
</pallas_src>

<mosaic_0001>
module attributes {stable_mosaic.version = 11 : i64} {
  func.func @_mlp_kernel(%arg0: i32, %arg1: memref<4x12xf32, #tpu.memory_space<vmem>>, %arg2: memref<12x128xbf16, #tpu.memory_space<vmem>>, %arg3: memref<1x128xbf16, #tpu.memory_space<vmem>>, %arg4: memref<128x256xbf16, #tpu.memory_space<vmem>>, %arg5: memref<1x256xbf16, #tpu.memory_space<vmem>>, %arg6: memref<256x512xbf16, #tpu.memory_space<vmem>>, %arg7: memref<1x512xbf16, #tpu.memory_space<vmem>>, %arg8: memref<512x128xbf16, #tpu.memory_space<vmem>>, %arg9: memref<1x128xbf16, #tpu.memory_space<vmem>>, %arg10: memref<128x128xbf16, #tpu.memory_space<vmem>>, %arg11: memref<1x128xbf16, #tpu.memory_space<vmem>>, %arg12: memref<128x8xbf16, #tpu.memory_space<vmem>>, %arg13: memref<1x8xbf16, #tpu.memory_space<vmem>>, %arg14: memref<4x8xf32, #tpu.memory_space<vmem>>) attributes {dimension_semantics = [#tpu.dimension_semantics<parallel>], iteration_bounds = array<i64: 1>, scalar_prefetch = 0 : i64, scratch_operands = 0 : i64, tpu.core_type = #tpu.core_type<tc>, window_params = [{transform_indices = @transform_0, window_bounds = array<i64: 4, 12>}, {pipeline_mode = #tpu.pipeline_mode<synchronous>, transform_indices = @transform_1, window_bounds = array<i64: 12, 128>}, {pipeline_mode = #tpu.pipeline_mode<synchronous>, transform_indices = @transform_2, window_bounds = array<i64: 1, 128>}, {pipeline_mode = #tpu.pipeline_mode<synchronous>, transform_indices = @transform_3, window_bounds = array<i64: 128, 256>}, {pipeline_mode = #tpu.pipeline_mode<synchronous>, transform_indices = @transform_4, window_bounds = array<i64: 1, 256>}, {pipeline_mode = #tpu.pipeline_mode<synchronous>, transform_indices = @transform_5, window_bounds = array<i64: 256, 512>}, {pipeline_mode = #tpu.pipeline_mode<synchronous>, transform_indices = @transform_6, window_bounds = array<i64: 1, 512>}, {pipeline_mode = #tpu.pipeline_mode<synchronous>, transform_indices = @transform_7, window_bounds = array<i64: 512, 128>}, {pipeline_mode = #tpu.pipeline_mode<synchronous>, transform_indices = @transform_8, window_bounds = array<i64: 1, 128>}, {pipeline_mode = #tpu.pipeline_mode<synchronous>, transform_indices = @transform_9, window_bounds = array<i64: 128, 128>}, {pipeline_mode = #tpu.pipeline_mode<synchronous>, transform_indices = @transform_10, window_bounds = array<i64: 1, 128>}, {pipeline_mode = #tpu.pipeline_mode<synchronous>, transform_indices = @transform_11, window_bounds = array<i64: 128, 8>}, {pipeline_mode = #tpu.pipeline_mode<synchronous>, transform_indices = @transform_12, window_bounds = array<i64: 1, 8>}, {transform_indices = @transform_13, window_bounds = array<i64: 4, 8>}]} {
    %c0 = arith.constant 0 : index
    %c0_0 = arith.constant 0 : index
    %0 = vector.load %arg1[%c0, %c0_0] : memref<4x12xf32, #tpu.memory_space<vmem>>, vector<4x12xf32>
    %1 = arith.truncf %0 : vector<4x12xf32> to vector<4x12xbf16>
    %c0_1 = arith.constant 0 : index
    %c0_2 = arith.constant 0 : index
    %2 = vector.load %arg2[%c0_1, %c0_2] : memref<12x128xbf16, #tpu.memory_space<vmem>>, vector<12x128xbf16>
    %cst = arith.constant dense<0.000000e+00> : vector<4x128xf32>
    %3 = tpu.matmul %1, %2, %cst {dimension_numbers = #tpu.dot_dimension_numbers<[1], [0], [0], [1], [0, 0, 1, 1], [], []>} : vector<4x12xbf16>, vector<12x128xbf16>, vector<4x128xf32> -> vector<4x128xf32>
    %4 = arith.truncf %3 : vector<4x128xf32> to vector<4x128xbf16>
    %c0_3 = arith.constant 0 : index
    %c0_4 = arith.constant 0 : index
    %5 = vector.load %arg3[%c0_3, %c0_4] : memref<1x128xbf16, #tpu.memory_space<vmem>>, vector<1x128xbf16>
    %6 = vector.broadcast %5 : vector<1x128xbf16> to vector<4x128xbf16>
    %7 = arith.addf %4, %6 : vector<4x128xbf16>
    %cst_5 = arith.constant 0.000000e+00 : bf16
    %8 = vector.broadcast %cst_5 : bf16 to vector<4x128xbf16>
    %9 = arith.maximumf %7, %8 : vector<4x128xbf16>
    %c0_6 = arith.constant 0 : index
    %c0_7 = arith.constant 0 : index
    %10 = vector.load %arg4[%c0_6, %c0_7] : memref<128x256xbf16, #tpu.memory_space<vmem>>, vector<128x256xbf16>
    %cst_8 = arith.constant dense<0.000000e+00> : vector<4x256xf32>
    %11 = tpu.matmul %9, %10, %cst_8 {dimension_numbers = #tpu.dot_dimension_numbers<[1], [0], [0], [1], [0, 0, 1, 1], [], []>} : vector<4x128xbf16>, vector<128x256xbf16>, vector<4x256xf32> -> vector<4x256xf32>
    %12 = arith.truncf %11 : vector<4x256xf32> to vector<4x256xbf16>
    %c0_9 = arith.constant 0 : index
    %c0_10 = arith.constant 0 : index
    %13 = vector.load %arg5[%c0_9, %c0_10] : memref<1x256xbf16, #tpu.memory_space<vmem>>, vector<1x256xbf16>
    %14 = vector.broadcast %13 : vector<1x256xbf16> to vector<4x256xbf16>
    %15 = arith.addf %12, %14 : vector<4x256xbf16>
    %cst_11 = arith.constant 0.000000e+00 : bf16
    %16 = vector.broadcast %cst_11 : bf16 to vector<4x256xbf16>
    %17 = arith.maximumf %15, %16 : vector<4x256xbf16>
    %c0_12 = arith.constant 0 : index
    %c0_13 = arith.constant 0 : index
    %18 = vector.load %arg6[%c0_12, %c0_13] : memref<256x512xbf16, #tpu.memory_space<vmem>>, vector<256x512xbf16>
    %cst_14 = arith.constant dense<0.000000e+00> : vector<4x512xf32>
    %19 = tpu.matmul %17, %18, %cst_14 {dimension_numbers = #tpu.dot_dimension_numbers<[1], [0], [0], [1], [0, 0, 1, 1], [], []>} : vector<4x256xbf16>, vector<256x512xbf16>, vector<4x512xf32> -> vector<4x512xf32>
    %20 = arith.truncf %19 : vector<4x512xf32> to vector<4x512xbf16>
    %c0_15 = arith.constant 0 : index
    %c0_16 = arith.constant 0 : index
    %21 = vector.load %arg7[%c0_15, %c0_16] : memref<1x512xbf16, #tpu.memory_space<vmem>>, vector<1x512xbf16>
    %22 = vector.broadcast %21 : vector<1x512xbf16> to vector<4x512xbf16>
    %23 = arith.addf %20, %22 : vector<4x512xbf16>
    %cst_17 = arith.constant 0.000000e+00 : bf16
    %24 = vector.broadcast %cst_17 : bf16 to vector<4x512xbf16>
    %25 = arith.maximumf %23, %24 : vector<4x512xbf16>
    %c0_18 = arith.constant 0 : index
    %c0_19 = arith.constant 0 : index
    %26 = vector.load %arg8[%c0_18, %c0_19] : memref<512x128xbf16, #tpu.memory_space<vmem>>, vector<512x128xbf16>
    %cst_20 = arith.constant dense<0.000000e+00> : vector<4x128xf32>
    %27 = tpu.matmul %25, %26, %cst_20 {dimension_numbers = #tpu.dot_dimension_numbers<[1], [0], [0], [1], [0, 0, 1, 1], [], []>} : vector<4x512xbf16>, vector<512x128xbf16>, vector<4x128xf32> -> vector<4x128xf32>
    %28 = arith.truncf %27 : vector<4x128xf32> to vector<4x128xbf16>
    %c0_21 = arith.constant 0 : index
    %c0_22 = arith.constant 0 : index
    %29 = vector.load %arg9[%c0_21, %c0_22] : memref<1x128xbf16, #tpu.memory_space<vmem>>, vector<1x128xbf16>
    %30 = vector.broadcast %29 : vector<1x128xbf16> to vector<4x128xbf16>
    %31 = arith.addf %28, %30 : vector<4x128xbf16>
    %cst_23 = arith.constant 0.000000e+00 : bf16
    %32 = vector.broadcast %cst_23 : bf16 to vector<4x128xbf16>
    %33 = arith.maximumf %31, %32 : vector<4x128xbf16>
    %c0_24 = arith.constant 0 : index
    %c0_25 = arith.constant 0 : index
    %34 = vector.load %arg10[%c0_24, %c0_25] : memref<128x128xbf16, #tpu.memory_space<vmem>>, vector<128x128xbf16>
    %cst_26 = arith.constant dense<0.000000e+00> : vector<4x128xf32>
    %35 = tpu.matmul %33, %34, %cst_26 {dimension_numbers = #tpu.dot_dimension_numbers<[1], [0], [0], [1], [0, 0, 1, 1], [], []>} : vector<4x128xbf16>, vector<128x128xbf16>, vector<4x128xf32> -> vector<4x128xf32>
    %36 = arith.truncf %35 : vector<4x128xf32> to vector<4x128xbf16>
    %c0_27 = arith.constant 0 : index
    %c0_28 = arith.constant 0 : index
    %37 = vector.load %arg11[%c0_27, %c0_28] : memref<1x128xbf16, #tpu.memory_space<vmem>>, vector<1x128xbf16>
    %38 = vector.broadcast %37 : vector<1x128xbf16> to vector<4x128xbf16>
    %39 = arith.addf %36, %38 : vector<4x128xbf16>
    %cst_29 = arith.constant 0.000000e+00 : bf16
    %40 = vector.broadcast %cst_29 : bf16 to vector<4x128xbf16>
    %41 = arith.maximumf %39, %40 : vector<4x128xbf16>
    %c0_30 = arith.constant 0 : index
    %c0_31 = arith.constant 0 : index
    %42 = vector.load %arg12[%c0_30, %c0_31] : memref<128x8xbf16, #tpu.memory_space<vmem>>, vector<128x8xbf16>
    %cst_32 = arith.constant dense<0.000000e+00> : vector<4x8xf32>
    %43 = tpu.matmul %41, %42, %cst_32 {dimension_numbers = #tpu.dot_dimension_numbers<[1], [0], [0], [1], [0, 0, 1, 1], [], []>} : vector<4x128xbf16>, vector<128x8xbf16>, vector<4x8xf32> -> vector<4x8xf32>
    %c0_33 = arith.constant 0 : index
    %c0_34 = arith.constant 0 : index
    %44 = vector.load %arg13[%c0_33, %c0_34] : memref<1x8xbf16, #tpu.memory_space<vmem>>, vector<1x8xbf16>
    %45 = arith.extf %44 : vector<1x8xbf16> to vector<1x8xf32>
    %46 = vector.broadcast %45 : vector<1x8xf32> to vector<4x8xf32>
    %47 = arith.addf %43, %46 : vector<4x8xf32>
    %c0_35 = arith.constant 0 : index
    %c0_36 = arith.constant 0 : index
    %48 = vector.load %arg14[%c0_35, %c0_36] : memref<4x8xf32, #tpu.memory_space<vmem>>, vector<4x8xf32>
    tpu.vector_store %arg14[%c0_35, %c0_36], %47 {strides = array<i32>} : memref<4x8xf32, #tpu.memory_space<vmem>>, vector<4x8xf32>,
    return
  }
  func.func @transform_0(%arg0: i32) -> (i32, i32) {
    %c0_i32 = arith.constant 0 : i32
    %c0_i32_0 = arith.constant 0 : i32
    return %arg0, %c0_i32 : i32, i32
  }
  func.func @transform_1(%arg0: i32) -> (i32, i32) {
    %c0_i32 = arith.constant 0 : i32
    %c0_i32_0 = arith.constant 0 : i32
    %c0_i32_1 = arith.constant 0 : i32
    return %c0_i32, %c0_i32_0 : i32, i32
  }
  func.func @transform_2(%arg0: i32) -> (i32, i32) {
    %c0_i32 = arith.constant 0 : i32
    %c0_i32_0 = arith.constant 0 : i32
    %c0_i32_1 = arith.constant 0 : i32
    return %c0_i32, %c0_i32_0 : i32, i32
  }
  func.func @transform_3(%arg0: i32) -> (i32, i32) {
    %c0_i32 = arith.constant 0 : i32
    %c0_i32_0 = arith.constant 0 : i32
    %c0_i32_1 = arith.constant 0 : i32
    return %c0_i32, %c0_i32_0 : i32, i32
  }
  func.func @transform_4(%arg0: i32) -> (i32, i32) {
    %c0_i32 = arith.constant 0 : i32
    %c0_i32_0 = arith.constant 0 : i32
    %c0_i32_1 = arith.constant 0 : i32
    return %c0_i32, %c0_i32_0 : i32, i32
  }
  func.func @transform_5(%arg0: i32) -> (i32, i32) {
    %c0_i32 = arith.constant 0 : i32
    %c0_i32_0 = arith.constant 0 : i32
    %c0_i32_1 = arith.constant 0 : i32
    return %c0_i32, %c0_i32_0 : i32, i32
  }
  func.func @transform_6(%arg0: i32) -> (i32, i32) {
    %c0_i32 = arith.constant 0 : i32
    %c0_i32_0 = arith.constant 0 : i32
    %c0_i32_1 = arith.constant 0 : i32
    return %c0_i32, %c0_i32_0 : i32, i32
  }
  func.func @transform_7(%arg0: i32) -> (i32, i32) {
    %c0_i32 = arith.constant 0 : i32
    %c0_i32_0 = arith.constant 0 : i32
    %c0_i32_1 = arith.constant 0 : i32
    return %c0_i32, %c0_i32_0 : i32, i32
  }
  func.func @transform_8(%arg0: i32) -> (i32, i32) {
    %c0_i32 = arith.constant 0 : i32
    %c0_i32_0 = arith.constant 0 : i32
    %c0_i32_1 = arith.constant 0 : i32
    return %c0_i32, %c0_i32_0 : i32, i32
  }
  func.func @transform_9(%arg0: i32) -> (i32, i32) {
    %c0_i32 = arith.constant 0 : i32
    %c0_i32_0 = arith.constant 0 : i32
    %c0_i32_1 = arith.constant 0 : i32
    return %c0_i32, %c0_i32_0 : i32, i32
  }
  func.func @transform_10(%arg0: i32) -> (i32, i32) {
    %c0_i32 = arith.constant 0 : i32
    %c0_i32_0 = arith.constant 0 : i32
    %c0_i32_1 = arith.constant 0 : i32
    return %c0_i32, %c0_i32_0 : i32, i32
  }
  func.func @transform_11(%arg0: i32) -> (i32, i32) {
    %c0_i32 = arith.constant 0 : i32
    %c0_i32_0 = arith.constant 0 : i32
    %c0_i32_1 = arith.constant 0 : i32
    return %c0_i32, %c0_i32_0 : i32, i32
  }
  func.func @transform_12(%arg0: i32) -> (i32, i32) {
    %c0_i32 = arith.constant 0 : i32
    %c0_i32_0 = arith.constant 0 : i32
    %c0_i32_1 = arith.constant 0 : i32
    return %c0_i32, %c0_i32_0 : i32, i32
  }
  func.func @transform_13(%arg0: i32) -> (i32, i32) {
    %c0_i32 = arith.constant 0 : i32
    %c0_i32_0 = arith.constant 0 : i32
    return %arg0, %c0_i32 : i32, i32
  }
}

</mosaic_0001>

<llo_original>
// kernel: video_audio_forward.1
$region0: #{video_audio_forward.1}
  #allocation0 [shape = 'u32[]', space=smem, size = 0x4, offset = 0x4, fixed_abs, tag = 'smem constant byte address 0x4 - core index']
  #allocation1 [shape = 'u32[72,128]{1,0:T(1,128)}', space=vmem, size = 0x9000, scoped, tag = 'internal scratch']
  %s0 = inlined_call_operand.hbm [shape: f32[4,12], index: 0, kind: input, shape index: {}]
  %s1 = inlined_call_operand.vmem [shape: bf16[12,128], index: 1, kind: input, shape index: {}]
  %s2 = inlined_call_operand.vmem [shape: bf16[1,128], index: 2, kind: input, shape index: {}]
  %s3 = inlined_call_operand.hbm [shape: bf16[128,256], index: 3, kind: input, shape index: {}]
  %s4 = inlined_call_operand.vmem [shape: bf16[1,256], index: 4, kind: input, shape index: {}]
  %s5 = inlined_call_operand.hbm [shape: bf16[256,512], index: 5, kind: input, shape index: {}]
  %s6 = inlined_call_operand.hbm [shape: bf16[1,512], index: 6, kind: input, shape index: {}]
  %s7 = inlined_call_operand.hbm [shape: bf16[512,128], index: 7, kind: input, shape index: {}]
  %s8 = inlined_call_operand.hbm [shape: bf16[1,128], index: 8, kind: input, shape index: {}]
  %s9 = inlined_call_operand.vmem [shape: bf16[128,128], index: 9, kind: input, shape index: {}]
  %s10 = inlined_call_operand.hbm [shape: bf16[1,128], index: 10, kind: input, shape index: {}]
  %s11 = inlined_call_operand.vmem [shape: bf16[128,8], index: 11, kind: input, shape index: {}]
  %s12 = inlined_call_operand.hbm [shape: bf16[1,8], index: 12, kind: input, shape index: {}]
  %s13 = inlined_call_operand.hbm [shape: f32[4,8], index: 13, kind: output, shape index: {}]
  %s14 = sld [smem:[#allocation0]]
  $region94: #{video_audio_forward.1} parent=0
    _
  %s16 = ssub.s32 1, %s14
  %s17 = scalar_select 0, %s16, %s14
  $region1: #{video_audio_forward.1} parent=0
    #allocation2 [shape = 'u8[2048]{0}', space=vmem, size = 0x800, scoped, tag = 'input window, operand 0, single buffered']
    #allocation3 [shape = 's32[1]{0}', space=sflag, size = 0x4, scoped, tag = 'scoped memory for video_audio_forward.1']
    #allocation4 [shape = 's32[1]{0}', space=sflag, size = 0x4, scoped, tag = 'scoped memory for video_audio_forward.1']
    #allocation5 [shape = 'u8[65536]{0}', space=vmem, size = 0x10000, scoped, tag = 'input window, operand 3, single buffered']
    #allocation6 [shape = 's32[1]{0}', space=sflag, size = 0x4, scoped, tag = 'scoped memory for video_audio_forward.1']
    #allocation7 [shape = 'u8[262144]{0}', space=vmem, size = 0x40000, scoped, tag = 'input window, operand 5, single buffered']
    #allocation8 [shape = 'u8[2048]{0}', space=vmem, size = 0x800, scoped, tag = 'input window, operand 6, single buffered']
    #allocation9 [shape = 's32[1]{0}', space=sflag, size = 0x4, scoped, tag = 'scoped memory for video_audio_forward.1']
    #allocation10 [shape = 'u8[131072]{0}', space=vmem, size = 0x20000, scoped, tag = 'input window, operand 7, single buffered']
    #allocation11 [shape = 'u8[512]{0}', space=vmem, size = 0x400, scoped, tag = 'input window, operand 8, single buffered']
    #allocation12 [shape = 's32[1]{0}', space=sflag, size = 0x4, scoped, tag = 'scoped memory for video_audio_forward.1']
    #allocation13 [shape = 'u8[512]{0}', space=vmem, size = 0x400, scoped, tag = 'input window, operand 10, single buffered']
    #allocation14 [shape = 'u8[512]{0}', space=vmem, size = 0x400, scoped, tag = 'input window, operand 12, single buffered']
    #allocation15 [shape = 's32[1]{0}', space=sflag, size = 0x4, scoped, tag = 'scoped memory for video_audio_forward.1']
    #allocation16 [shape = 'u8[2048]{0}', space=vmem, size = 0x800, scoped, tag = 'output window, operand 0, single buffered']
    %18 = vsyncpa [#allocation3], 0
    %19 = vsyncpa [#allocation6], 0
    %20 = vsyncpa [#allocation9], 0
    %21 = vsyncpa [#allocation12], 0
    %22 = vsyncpa [#allocation15], 0
    %23 = vsyncpa [#allocation4], 0
    // Predicated region
    $region2: #{video_audio_forward.1} parent=1 // pred_check
      _
    $region3: #{video_audio_forward.1} parent=1 // pred_check_branch
      %25 = sbr.rel (0) target = $region5
    $region4: #{video_audio_forward.1} parent=1 // pred_region
      %27 = vsyncadd [#allocation3], 0
      %s29 = sshll.u32 %s0, 4
      %s30 = int_to_ptr.hbm [resolvable:$true] %s29
      %s31 = sshll.u32 [#allocation2], 4
      %s32 = int_to_ptr.vmem [resolvable:$true] %s31
      %34 = dma.hbm_to_vmem [thread:$0]  %s30, 64, %s32, [#allocation3]
    $region5: #{video_audio_forward.1} parent=1 // pred_fallthru
      _
    // Predicated region
    $region6: #{video_audio_forward.1} parent=1 // pred_check
      _
    $region7: #{video_audio_forward.1} parent=1 // pred_check_branch
      %36 = sbr.rel (0) target = $region9
    $region8: #{video_audio_forward.1} parent=1 // pred_region
      _
    $region9: #{video_audio_forward.1} parent=1 // pred_fallthru
      _
    // Predicated region
    $region10: #{video_audio_forward.1} parent=1 // pred_check
      _
    $region11: #{video_audio_forward.1} parent=1 // pred_check_branch
      %38 = sbr.rel (0) target = $region13
    $region12: #{video_audio_forward.1} parent=1 // pred_region
      _
    $region13: #{video_audio_forward.1} parent=1 // pred_fallthru
      _
    // Predicated region
    $region14: #{video_audio_forward.1} parent=1 // pred_check
      _
    $region15: #{video_audio_forward.1} parent=1 // pred_check_branch
      %40 = sbr.rel (0) target = $region17
    $region16: #{video_audio_forward.1} parent=1 // pred_region
      %42 = vsyncadd [#allocation6], 0
      %s43 = sshll.u32 %s3, 4
      %s44 = int_to_ptr.hbm [resolvable:$true] %s43
      %s45 = sshll.u32 [#allocation5], 4
      %s46 = int_to_ptr.vmem [resolvable:$true] %s45
      %51 = dma.hbm_to_vmem [thread:$0]  %s44, 2048, %s46, [#allocation6], 128, 128, 8
    $region17: #{video_audio_forward.1} parent=1 // pred_fallthru
      _
    // Predicated region
    $region18: #{video_audio_forward.1} parent=1 // pred_check
      _
    $region19: #{video_audio_forward.1} parent=1 // pred_check_branch
      %53 = sbr.rel (0) target = $region21
    $region20: #{video_audio_forward.1} parent=1 // pred_region
      _
    $region21: #{video_audio_forward.1} parent=1 // pred_fallthru
      _
    // Predicated region
    $region22: #{video_audio_forward.1} parent=1 // pred_check
      _
    $region23: #{video_audio_forward.1} parent=1 // pred_check_branch
      %55 = sbr.rel (0) target = $region25
    $region24: #{video_audio_forward.1} parent=1 // pred_region
      %57 = vsyncadd [#allocation6], 0
      %s58 = sshll.u32 %s5, 4
      %s59 = int_to_ptr.hbm [resolvable:$true] %s58
      %s60 = sshll.u32 [#allocation7], 4
      %s61 = int_to_ptr.vmem [resolvable:$true] %s60
      %66 = dma.hbm_to_vmem [thread:$0]  %s59, 8192, %s61, [#allocation6], 256, 256, 16
    $region25: #{video_audio_forward.1} parent=1 // pred_fallthru
      _
    // Predicated region
    $region26: #{video_audio_forward.1} parent=1 // pred_check
      _
    $region27: #{video_audio_forward.1} parent=1 // pred_check_branch
      %68 = sbr.rel (0) target = $region29
    $region28: #{video_audio_forward.1} parent=1 // pred_region
      %70 = vsyncadd [#allocation9], 0
      %s72 = sshll.u32 %s6, 4
      %s73 = int_to_ptr.hbm [resolvable:$true] %s72
      %s74 = sshll.u32 [#allocation8], 4
      %s75 = int_to_ptr.vmem [resolvable:$true] %s74
      %77 = dma.hbm_to_vmem [thread:$0]  %s73, 64, %s75, [#allocation9]
    $region29: #{video_audio_forward.1} parent=1 // pred_fallthru
      _
    // Predicated region
    $region30: #{video_audio_forward.1} parent=1 // pred_check
      _
    $region31: #{video_audio_forward.1} parent=1 // pred_check_branch
      %79 = sbr.rel (0) target = $region33
    $region32: #{video_audio_forward.1} parent=1 // pred_region
      %81 = vsyncadd [#allocation9], 0
      %s82 = sshll.u32 %s7, 4
      %s83 = int_to_ptr.hbm [resolvable:$true] %s82
      %s84 = sshll.u32 [#allocation10], 4
      %s85 = int_to_ptr.vmem [resolvable:$true] %s84
      %90 = dma.hbm_to_vmem [thread:$0]  %s83, 4096, %s85, [#allocation9], 64, 64, 4
    $region33: #{video_audio_forward.1} parent=1 // pred_fallthru
      _
    // Predicated region
    $region34: #{video_audio_forward.1} parent=1 // pred_check
      _
    $region35: #{video_audio_forward.1} parent=1 // pred_check_branch
      %92 = sbr.rel (0) target = $region37
    $region36: #{video_audio_forward.1} parent=1 // pred_region
      %94 = vsyncadd [#allocation12], 0
      %s96 = sshll.u32 %s8, 4
      %s97 = int_to_ptr.hbm [resolvable:$true] %s96
      %s98 = sshll.u32 [#allocation11], 4
      %s99 = int_to_ptr.vmem [resolvable:$true] %s98
      %101 = dma.hbm_to_vmem [thread:$0]  %s97, 16, %s99, [#allocation12]
    $region37: #{video_audio_forward.1} parent=1 // pred_fallthru
      _
    // Predicated region
    $region38: #{video_audio_forward.1} parent=1 // pred_check
      _
    $region39: #{video_audio_forward.1} parent=1 // pred_check_branch
      %103 = sbr.rel (0) target = $region41
    $region40: #{video_audio_forward.1} parent=1 // pred_region
      _
    $region41: #{video_audio_forward.1} parent=1 // pred_fallthru
      _
    // Predicated region
    $region42: #{video_audio_forward.1} parent=1 // pred_check
      _
    $region43: #{video_audio_forward.1} parent=1 // pred_check_branch
      %105 = sbr.rel (0) target = $region45
    $region44: #{video_audio_forward.1} parent=1 // pred_region
      %107 = vsyncadd [#allocation12], 0
      %s109 = sshll.u32 %s10, 4
      %s110 = int_to_ptr.hbm [resolvable:$true] %s109
      %s111 = sshll.u32 [#allocation13], 4
      %s112 = int_to_ptr.vmem [resolvable:$true] %s111
      %114 = dma.hbm_to_vmem [thread:$0]  %s110, 16, %s112, [#allocation12]
    $region45: #{video_audio_forward.1} parent=1 // pred_fallthru
      _
    // Predicated region
    $region46: #{video_audio_forward.1} parent=1 // pred_check
      _
    $region47: #{video_audio_forward.1} parent=1 // pred_check_branch
      %116 = sbr.rel (0) target = $region49
    $region48: #{video_audio_forward.1} parent=1 // pred_region
      _
    $region49: #{video_audio_forward.1} parent=1 // pred_fallthru
      _
    // Predicated region
    $region50: #{video_audio_forward.1} parent=1 // pred_check
      _
    $region51: #{video_audio_forward.1} parent=1 // pred_check_branch
      %118 = sbr.rel (0) target = $region53
    $region52: #{video_audio_forward.1} parent=1 // pred_region
      %120 = vsyncadd [#allocation15], 0
      %s122 = sshll.u32 %s12, 4
      %s123 = int_to_ptr.hbm [resolvable:$true] %s122
      %s124 = sshll.u32 [#allocation14], 4
      %s125 = int_to_ptr.vmem [resolvable:$true] %s124
      %127 = dma.hbm_to_vmem [thread:$0]  %s123, 16, %s125, [#allocation15]
    $region53: #{video_audio_forward.1} parent=1 // pred_fallthru
      _
    // Predicated region
    $region54: #{video_audio_forward.1} parent=1 // pred_check
      _
    $region55: #{video_audio_forward.1} parent=1 // pred_check_branch
      %129 = sbr.rel (0) target = $region57
    $region56: #{video_audio_forward.1} parent=1 // pred_region
      %131 = dma.done [#allocation3], 64
    $region57: #{video_audio_forward.1} parent=1 // pred_fallthru
      _
    // Predicated region
    $region58: #{video_audio_forward.1} parent=1 // pred_check
      _
    $region59: #{video_audio_forward.1} parent=1 // pred_check_branch
      %133 = sbr.rel (0) target = $region61
    $region60: #{video_audio_forward.1} parent=1 // pred_region
      %135 = dma.done [#allocation6], 2048
    $region61: #{video_audio_forward.1} parent=1 // pred_fallthru
      _
    // Predicated region
    $region62: #{video_audio_forward.1} parent=1 // pred_check
      _
    $region63: #{video_audio_forward.1} parent=1 // pred_check_branch
      %137 = sbr.rel (0) target = $region65
    $region64: #{video_audio_forward.1} parent=1 // pred_region
      %139 = dma.done [#allocation6], 8192
    $region65: #{video_audio_forward.1} parent=1 // pred_fallthru
      _
    // Predicated region
    $region66: #{video_audio_forward.1} parent=1 // pred_check
      _
    $region67: #{video_audio_forward.1} parent=1 // pred_check_branch
      %141 = sbr.rel (0) target = $region69
    $region68: #{video_audio_forward.1} parent=1 // pred_region
      %143 = dma.done [#allocation9], 64
    $region69: #{video_audio_forward.1} parent=1 // pred_fallthru
      _
    // Predicated region
    $region70: #{video_audio_forward.1} parent=1 // pred_check
      _
    $region71: #{video_audio_forward.1} parent=1 // pred_check_branch
      %145 = sbr.rel (0) target = $region73
    $region72: #{video_audio_forward.1} parent=1 // pred_region
      %147 = dma.done [#allocation9], 4096
    $region73: #{video_audio_forward.1} parent=1 // pred_fallthru
      _
    // Predicated region
    $region74: #{video_audio_forward.1} parent=1 // pred_check
      _
    $region75: #{video_audio_forward.1} parent=1 // pred_check_branch
      %149 = sbr.rel (0) target = $region77
    $region76: #{video_audio_forward.1} parent=1 // pred_region
      %151 = dma.done [#allocation12], 16
    $region77: #{video_audio_forward.1} parent=1 // pred_fallthru
      _
    // Predicated region
    $region78: #{video_audio_forward.1} parent=1 // pred_check
      _
    $region79: #{video_audio_forward.1} parent=1 // pred_check_branch
      %153 = sbr.rel (0) target = $region81
    $region80: #{video_audio_forward.1} parent=1 // pred_region
      %155 = dma.done [#allocation12], 16
    $region81: #{video_audio_forward.1} parent=1 // pred_fallthru
      _
    // Predicated region
    $region82: #{video_audio_forward.1} parent=1 // pred_check
      _
    $region83: #{video_audio_forward.1} parent=1 // pred_check_branch
      %157 = sbr.rel (0) target = $region85
    $region84: #{video_audio_forward.1} parent=1 // pred_region
      %159 = dma.done [#allocation15], 16
    $region85: #{video_audio_forward.1} parent=1 // pred_fallthru
      _
    %v161 = vld [vmem:[#allocation2] sm:$0xf]
    %v162 = vpack.c.bf16 %v161, %v161
    %v163 = vld [vmem:[%s1] sm:$0xf]
    %v164 = vld [vmem:[%s1 + $0x4] sm:$0x3]
    %v167 = vunpack.c.l.b16 %v163
    %v168 = vunpack.c.l.b16 %v164
    %v169 = vpack.c.b16 %v168, %v167
    %vm170 = vcmask 97280
    %v172 = vsel %vm170, %v162, 0
    %vm174 = vcmask 1045504
    %v176 = vsel %vm174, %v169, 0
    %178 = vmatpush.bf16.msra.mxu0 0
    %179 = vmatpush.bf16.msra.mxu0 0
    %180 = vmatpush.bf16.msra.mxu0 0
    %181 = vmatpush.bf16.msra.mxu0 0
    %182 = vmatpush.bf16.msra.mxu0 0
    %183 = vmatpush.bf16.msra.mxu0 0
    %184 = vmatpush.bf16.msra.mxu0 0
    %185 = vmatpush.bf16.msra.mxu0 %v176
    %186 = vmatmul.bf16.gmra.mxu0 %v172
    %v187 = vpop.f32.mrf.mxu0
    %v188 = vadd.f32 0.0, %v187
    %v189 = vpop.f32.mrf.mxu0
    %190 = vdwg.mxu0
    %v191 = vpack.c.bf16 %v188, %v188
    %v192 = vld [vmem:[%s2] sm:$0x1]
    %v194 = vpack.i.b16 %v192, %v192
    %v196 = vperm.slane %v194, 0
    %v197 = vunpack.c.l.bf16 %v191
    %v198 = vunpack.c.l.bf16 %v196
    %v199 = vadd.f32 %v197, %v198
    %v200 = vpack.c.bf16 %v199, %v199
    %v201 = vunpack.c.l.bf16 %v200
    %v202 = vmax.f32 %v201, 0.0
    %v203 = vpack.c.bf16 %v202, %v202
    %v204 = vld [vmem:[#allocation5] sm:$0xff]
    %v205 = vld [vmem:[#allocation5 + $0x8] sm:$0xff]
    %v206 = vld [vmem:[#allocation5 + $0x10] sm:$0xff]
    %v207 = vld [vmem:[#allocation5 + $0x18] sm:$0xff]
    %v208 = vld [vmem:[#allocation5 + $0x20] sm:$0xff]
    %v209 = vld [vmem:[#allocation5 + $0x28] sm:$0xff]
    %v210 = vld [vmem:[#allocation5 + $0x30] sm:$0xff]
    %v211 = vld [vmem:[#allocation5 + $0x38] sm:$0xff]
    %v212 = vld [vmem:[#allocation5 + $0x40] sm:$0xff]
    %v213 = vld [vmem:[#allocation5 + $0x48] sm:$0xff]
    %v214 = vld [vmem:[#allocation5 + $0x50] sm:$0xff]
    %v215 = vld [vmem:[#allocation5 + $0x58] sm:$0xff]
    %v216 = vld [vmem:[#allocation5 + $0x60] sm:$0xff]
    %v217 = vld [vmem:[#allocation5 + $0x68] sm:$0xff]
    %v218 = vld [vmem:[#allocation5 + $0x70] sm:$0xff]
    %v219 = vld [vmem:[#allocation5 + $0x78] sm:$0xff]
    %v236 = vunpack.c.l.b16 %v204
    %v237 = vunpack.c.h.b16 %v204
    %v238 = vunpack.c.l.b16 %v205
    %v239 = vunpack.c.h.b16 %v205
    %v240 = vunpack.c.l.b16 %v206
    %v241 = vunpack.c.h.b16 %v206
    %v242 = vunpack.c.l.b16 %v207
    %v243 = vunpack.c.h.b16 %v207
    %v244 = vunpack.c.l.b16 %v208
    %v245 = vunpack.c.h.b16 %v208
    %v246 = vunpack.c.l.b16 %v209
    %v247 = vunpack.c.h.b16 %v209
    %v248 = vunpack.c.l.b16 %v210
    %v249 = vunpack.c.h.b16 %v210
    %v250 = vunpack.c.l.b16 %v211
    %v251 = vunpack.c.h.b16 %v211
    %v252 = vunpack.c.l.b16 %v212
    %v253 = vunpack.c.h.b16 %v212
    %v254 = vunpack.c.l.b16 %v213
    %v255 = vunpack.c.h.b16 %v213
    %v256 = vunpack.c.l.b16 %v214
    %v257 = vunpack.c.h.b16 %v214
    %v258 = vunpack.c.l.b16 %v215
    %v259 = vunpack.c.h.b16 %v215
    %v260 = vunpack.c.l.b16 %v216
    %v261 = vunpack.c.h.b16 %v216
    %v262 = vunpack.c.l.b16 %v217
    %v263 = vunpack.c.h.b16 %v217
    %v264 = vunpack.c.l.b16 %v218
    %v265 = vunpack.c.h.b16 %v218
    %v266 = vunpack.c.l.b16 %v219
    %v267 = vunpack.c.h.b16 %v219
    %v268 = vpack.c.b16 %v238, %v236
    %v269 = vpack.c.b16 %v239, %v237
    %v270 = vpack.c.b16 %v242, %v240
    %v271 = vpack.c.b16 %v243, %v241
    %v272 = vpack.c.b16 %v246, %v244
    %v273 = vpack.c.b16 %v247, %v245
    %v274 = vpack.c.b16 %v250, %v248
    %v275 = vpack.c.b16 %v251, %v249
    %v276 = vpack.c.b16 %v254, %v252
    %v277 = vpack.c.b16 %v255, %v253
    %v278 = vpack.c.b16 %v258, %v256
    %v279 = vpack.c.b16 %v259, %v257
    %v280 = vpack.c.b16 %v262, %v260
    %v281 = vpack.c.b16 %v263, %v261
    %v282 = vpack.c.b16 %v266, %v264
    %v283 = vpack.c.b16 %v267, %v265
    %300 = vmatpush.bf16.msra.mxu0 %v282
    %301 = vmatpush.bf16.msra.mxu0 %v280
    %302 = vmatpush.bf16.msra.mxu0 %v278
    %303 = vmatpush.bf16.msra.mxu0 %v276
    %304 = vmatpush.bf16.msra.mxu0 %v274
    %305 = vmatpush.bf16.msra.mxu0 %v272
    %306 = vmatpush.bf16.msra.mxu0 %v270
    %307 = vmatpush.bf16.msra.mxu0 %v268
    %308 = vmatmul.bf16.gmra.mxu0 %v203
    %v309 = vpop.f32.mrf.mxu0
    %v310 = vadd.f32 0.0, %v309
    %v311 = vpop.f32.mrf.mxu0
    %312 = vdwg.mxu0
    %313 = vmatpush.bf16.msra.mxu0 %v283
    %314 = vmatpush.bf16.msra.mxu0 %v281
    %315 = vmatpush.bf16.msra.mxu0 %v279
    %316 = vmatpush.bf16.msra.mxu0 %v277
    %317 = vmatpush.bf16.msra.mxu0 %v275
    %318 = vmatpush.bf16.msra.mxu0 %v273
    %319 = vmatpush.bf16.msra.mxu0 %v271
    %320 = vmatpush.bf16.msra.mxu0 %v269
    %321 = vmatmul.bf16.gmra.mxu0 %v203
    %v322 = vpop.f32.mrf.mxu0
    %v323 = vadd.f32 0.0, %v322
    %v324 = vpop.f32.mrf.mxu0
    %325 = vdwg.mxu0
    %v326 = vpack.c.bf16 %v323, %v310
    %v327 = vld [vmem:[%s4] sm:$0x3]
    %329 = vst [vmem:[#allocation1] ss:$9 sm:$0xff] %v327
    %v330 = vld [vmem:[#allocation1] sm:$0xff]
    %v331 = vld [vmem:[#allocation1 + $0x9] sm:$0xff]
    %v332 = vpack.i.b16 %v330, %v330
    %v334 = vperm.slane %v332, 0
    %v335 = vpack.i.b16 %v331, %v331
    %v337 = vperm.slane %v335, 0
    %v338 = vunpack.c.l.bf16 %v326
    %v339 = vunpack.c.h.bf16 %v326
    %v340 = vunpack.c.l.bf16 %v334
    %v341 = vunpack.c.l.bf16 %v337
    %v342 = vadd.f32 %v338, %v340
    %v343 = vadd.f32 %v339, %v341
    %v344 = vpack.c.bf16 %v343, %v342
    %v345 = vunpack.c.l.bf16 %v344
    %v346 = vunpack.c.h.bf16 %v344
    %v347 = vmax.f32 %v345, 0.0
    %v348 = vmax.f32 %v346, 0.0
    %v349 = vpack.c.bf16 %v347, %v347
    %v350 = vpack.c.bf16 %v348, %v348
    %v351 = vld [vmem:[#allocation7] sm:$0xff]
    %v352 = vld [vmem:[#allocation7 + $0x8] sm:$0xff]
    %v353 = vld [vmem:[#allocation7 + $0x10] sm:$0xff]
    %v354 = vld [vmem:[#allocation7 + $0x18] sm:$0xff]
    %v355 = vld [vmem:[#allocation7 + $0x20] sm:$0xff]
    %v356 = vld [vmem:[#allocation7 + $0x28] sm:$0xff]
    %v357 = vld [vmem:[#allocation7 + $0x30] sm:$0xff]
    %v358 = vld [vmem:[#allocation7 + $0x38] sm:$0xff]
    %v359 = vld [vmem:[#allocation7 + $0x40] sm:$0xff]
    %v360 = vld [vmem:[#allocation7 + $0x48] sm:$0xff]
    %v361 = vld [vmem:[#allocation7 + $0x50] sm:$0xff]
    %v362 = vld [vmem:[#allocation7 + $0x58] sm:$0xff]
    %v363 = vld [vmem:[#allocation7 + $0x60] sm:$0xff]
    %v364 = vld [vmem:[#allocation7 + $0x68] sm:$0xff]
    %v365 = vld [vmem:[#allocation7 + $0x70] sm:$0xff]
    %v366 = vld [vmem:[#allocation7 + $0x78] sm:$0xff]
    %v367 = vld [vmem:[#allocation7 + $0x80] sm:$0xff]
    %v368 = vld [vmem:[#allocation7 + $0x88] sm:$0xff]
    %v369 = vld [vmem:[#allocation7 + $0x90] sm:$0xff]
    %v370 = vld [vmem:[#allocation7 + $0x98] sm:$0xff]
    %v371 = vld [vmem:[#allocation7 + $0xa0] sm:$0xff]
    %v372 = vld [vmem:[#allocation7 + $0xa8] sm:$0xff]
    %v373 = vld [vmem:[#allocation7 + $0xb0] sm:$0xff]
    %v374 = vld [vmem:[#allocation7 + $0xb8] sm:$0xff]
    %v375 = vld [vmem:[#allocation7 + $0xc0] sm:$0xff]
    %v376 = vld [vmem:[#allocation7 + $0xc8] sm:$0xff]
    %v377 = vld [vmem:[#allocation7 + $0xd0] sm:$0xff]
    %v378 = vld [vmem:[#allocation7 + $0xd8] sm:$0xff]
    %v379 = vld [vmem:[#allocation7 + $0xe0] sm:$0xff]
    %v380 = vld [vmem:[#allocation7 + $0xe8] sm:$0xff]
    %v381 = vld [vmem:[#allocation7 + $0xf0] sm:$0xff]
    %v382 = vld [vmem:[#allocation7 + $0xf8] sm:$0xff]
    %v383 = vld [vmem:[#allocation7 + $0x100] sm:$0xff]
    %v384 = vld [vmem:[#allocation7 + $0x108] sm:$0xff]
    %v385 = vld [vmem:[#allocation7 + $0x110] sm:$0xff]
    %v386 = vld [vmem:[#allocation7 + $0x118] sm:$0xff]
    %v387 = vld [vmem:[#allocation7 + $0x120] sm:$0xff]
    %v388 = vld [vmem:[#allocation7 + $0x128] sm:$0xff]
    %v389 = vld [vmem:[#allocation7 + $0x130] sm:$0xff]
    %v390 = vld [vmem:[#allocation7 + $0x138] sm:$0xff]
    %v391 = vld [vmem:[#allocation7 + $0x140] sm:$0xff]
    %v392 = vld [vmem:[#allocation7 + $0x148] sm:$0xff]
    %v393 = vld [vmem:[#allocation7 + $0x150] sm:$0xff]
    %v394 = vld [vmem:[#allocation7 + $0x158] sm:$0xff]
    %v395 = vld [vmem:[#allocation7 + $0x160] sm:$0xff]
    %v396 = vld [vmem:[#allocation7 + $0x168] sm:$0xff]
    %v397 = vld [vmem:[#allocation7 + $0x170] sm:$0xff]
    %v398 = vld [vmem:[#allocation7 + $0x178] sm:$0xff]
    %v399 = vld [vmem:[#allocation7 + $0x180] sm:$0xff]
    %v400 = vld [vmem:[#allocation7 + $0x188] sm:$0xff]
    %v401 = vld [vmem:[#allocation7 + $0x190] sm:$0xff]
    %v402 = vld [vmem:[#allocation7 + $0x198] sm:$0xff]
    %v403 = vld [vmem:[#allocation7 + $0x1a0] sm:$0xff]
    %v404 = vld [vmem:[#allocation7 + $0x1a8] sm:$0xff]
    %v405 = vld [vmem:[#allocation7 + $0x1b0] sm:$0xff]
    %v406 = vld [vmem:[#allocation7 + $0x1b8] sm:$0xff]
    %v407 = vld [vmem:[#allocation7 + $0x1c0] sm:$0xff]
    %v408 = vld [vmem:[#allocation7 + $0x1c8] sm:$0xff]
    %v409 = vld [vmem:[#allocation7 + $0x1d0] sm:$0xff]
    %v410 = vld [vmem:[#allocation7 + $0x1d8] sm:$0xff]
    %v411 = vld [vmem:[#allocation7 + $0x1e0] sm:$0xff]
    %v412 = vld [vmem:[#allocation7 + $0x1e8] sm:$0xff]
    %v413 = vld [vmem:[#allocation7 + $0x1f0] sm:$0xff]
    %v414 = vld [vmem:[#allocation7 + $0x1f8] sm:$0xff]
    %v479 = vunpack.c.l.b16 %v351
    %v480 = vunpack.c.h.b16 %v351
    %v481 = vunpack.c.l.b16 %v352
    %v482 = vunpack.c.h.b16 %v352
    %v483 = vunpack.c.l.b16 %v353
    %v484 = vunpack.c.h.b16 %v353
    %v485 = vunpack.c.l.b16 %v354
    %v486 = vunpack.c.h.b16 %v354
    %v487 = vunpack.c.l.b16 %v355
    %v488 = vunpack.c.h.b16 %v355
    %v489 = vunpack.c.l.b16 %v356
    %v490 = vunpack.c.h.b16 %v356
    %v491 = vunpack.c.l.b16 %v357
    %v492 = vunpack.c.h.b16 %v357
    %v493 = vunpack.c.l.b16 %v358
    %v494 = vunpack.c.h.b16 %v358
    %v495 = vunpack.c.l.b16 %v359
    %v496 = vunpack.c.h.b16 %v359
    %v497 = vunpack.c.l.b16 %v360
    %v498 = vunpack.c.h.b16 %v360
    %v499 = vunpack.c.l.b16 %v361
    %v500 = vunpack.c.h.b16 %v361
    %v501 = vunpack.c.l.b16 %v362
    %v502 = vunpack.c.h.b16 %v362
    %v503 = vunpack.c.l.b16 %v363
    %v504 = vunpack.c.h.b16 %v363
    %v505 = vunpack.c.l.b16 %v364
    %v506 = vunpack.c.h.b16 %v364
    %v507 = vunpack.c.l.b16 %v365
    %v508 = vunpack.c.h.b16 %v365
    %v509 = vunpack.c.l.b16 %v366
    %v510 = vunpack.c.h.b16 %v366
    %v511 = vunpack.c.l.b16 %v367
    %v512 = vunpack.c.h.b16 %v367
    %v513 = vunpack.c.l.b16 %v368
    %v514 = vunpack.c.h.b16 %v368
    %v515 = vunpack.c.l.b16 %v369
    %v516 = vunpack.c.h.b16 %v369
    %v517 = vunpack.c.l.b16 %v370
    %v518 = vunpack.c.h.b16 %v370
    %v519 = vunpack.c.l.b16 %v371
    %v520 = vunpack.c.h.b16 %v371
    %v521 = vunpack.c.l.b16 %v372
    %v522 = vunpack.c.h.b16 %v372
    %v523 = vunpack.c.l.b16 %v373
    %v524 = vunpack.c.h.b16 %v373
    %v525 = vunpack.c.l.b16 %v374
    %v526 = vunpack.c.h.b16 %v374
    %v527 = vunpack.c.l.b16 %v375
    %v528 = vunpack.c.h.b16 %v375
    %v529 = vunpack.c.l.b16 %v376
    %v530 = vunpack.c.h.b16 %v376
    %v531 = vunpack.c.l.b16 %v377
    %v532 = vunpack.c.h.b16 %v377
    %v533 = vunpack.c.l.b16 %v378
    %v534 = vunpack.c.h.b16 %v378
    %v535 = vunpack.c.l.b16 %v379
    %v536 = vunpack.c.h.b16 %v379
    %v537 = vunpack.c.l.b16 %v380
    %v538 = vunpack.c.h.b16 %v380
    %v539 = vunpack.c.l.b16 %v381
    %v540 = vunpack.c.h.b16 %v381
    %v541 = vunpack.c.l.b16 %v382
    %v542 = vunpack.c.h.b16 %v382
    %v543 = vunpack.c.l.b16 %v383
    %v544 = vunpack.c.h.b16 %v383
    %v545 = vunpack.c.l.b16 %v384
    %v546 = vunpack.c.h.b16 %v384
    %v547 = vunpack.c.l.b16 %v385
    %v548 = vunpack.c.h.b16 %v385
    %v549 = vunpack.c.l.b16 %v386
    %v550 = vunpack.c.h.b16 %v386
    %v551 = vunpack.c.l.b16 %v387
    %v552 = vunpack.c.h.b16 %v387
    %v553 = vunpack.c.l.b16 %v388
    %v554 = vunpack.c.h.b16 %v388
    %v555 = vunpack.c.l.b16 %v389
    %v556 = vunpack.c.h.b16 %v389
    %v557 = vunpack.c.l.b16 %v390
    %v558 = vunpack.c.h.b16 %v390
    %v559 = vunpack.c.l.b16 %v391
    %v560 = vunpack.c.h.b16 %v391
    %v561 = vunpack.c.l.b16 %v392
    %v562 = vunpack.c.h.b16 %v392
    %v563 = vunpack.c.l.b16 %v393
    %v564 = vunpack.c.h.b16 %v393
    %v565 = vunpack.c.l.b16 %v394
    %v566 = vunpack.c.h.b16 %v394
    %v567 = vunpack.c.l.b16 %v395
    %v568 = vunpack.c.h.b16 %v395
    %v569 = vunpack.c.l.b16 %v396
    %v570 = vunpack.c.h.b16 %v396
    %v571 = vunpack.c.l.b16 %v397
    %v572 = vunpack.c.h.b16 %v397
    %v573 = vunpack.c.l.b16 %v398
    %v574 = vunpack.c.h.b16 %v398
    %v575 = vunpack.c.l.b16 %v399
    %v576 = vunpack.c.h.b16 %v399
    %v577 = vunpack.c.l.b16 %v400
    %v578 = vunpack.c.h.b16 %v400
    %v579 = vunpack.c.l.b16 %v401
    %v580 = vunpack.c.h.b16 %v401
    %v581 = vunpack.c.l.b16 %v402
    %v582 = vunpack.c.h.b16 %v402
    %v583 = vunpack.c.l.b16 %v403
    %v584 = vunpack.c.h.b16 %v403
    %v585 = vunpack.c.l.b16 %v404
    %v586 = vunpack.c.h.b16 %v404
    %v587 = vunpack.c.l.b16 %v405
    %v588 = vunpack.c.h.b16 %v405
    %v589 = vunpack.c.l.b16 %v406
    %v590 = vunpack.c.h.b16 %v406
    %v591 = vunpack.c.l.b16 %v407
    %v592 = vunpack.c.h.b16 %v407
    %v593 = vunpack.c.l.b16 %v408
    %v594 = vunpack.c.h.b16 %v408
    %v595 = vunpack.c.l.b16 %v409
    %v596 = vunpack.c.h.b16 %v409
    %v597 = vunpack.c.l.b16 %v410
    %v598 = vunpack.c.h.b16 %v410
    %v599 = vunpack.c.l.b16 %v411
    %v600 = vunpack.c.h.b16 %v411
    %v601 = vunpack.c.l.b16 %v412
    %v602 = vunpack.c.h.b16 %v412
    %v603 = vunpack.c.l.b16 %v413
    %v604 = vunpack.c.h.b16 %v413
    %v605 = vunpack.c.l.b16 %v414
    %v606 = vunpack.c.h.b16 %v414
    %v607 = vpack.c.b16 %v483, %v479
    %v608 = vpack.c.b16 %v484, %v480
    %v609 = vpack.c.b16 %v485, %v481
    %v610 = vpack.c.b16 %v486, %v482
    %v611 = vpack.c.b16 %v491, %v487
    %v612 = vpack.c.b16 %v492, %v488
    %v613 = vpack.c.b16 %v493, %v489
    %v614 = vpack.c.b16 %v494, %v490
    %v615 = vpack.c.b16 %v499, %v495
    %v616 = vpack.c.b16 %v500, %v496
    %v617 = vpack.c.b16 %v501, %v497
    %v618 = vpack.c.b16 %v502, %v498
    %v619 = vpack.c.b16 %v507, %v503
    %v620 = vpack.c.b16 %v508, %v504
    %v621 = vpack.c.b16 %v509, %v505
    %v622 = vpack.c.b16 %v510, %v506
    %v623 = vpack.c.b16 %v515, %v511
    %v624 = vpack.c.b16 %v516, %v512
    %v625 = vpack.c.b16 %v517, %v513
    %v626 = vpack.c.b16 %v518, %v514
    %v627 = vpack.c.b16 %v523, %v519
    %v628 = vpack.c.b16 %v524, %v520
    %v629 = vpack.c.b16 %v525, %v521
    %v630 = vpack.c.b16 %v526, %v522
    %v631 = vpack.c.b16 %v531, %v527
    %v632 = vpack.c.b16 %v532, %v528
    %v633 = vpack.c.b16 %v533, %v529
    %v634 = vpack.c.b16 %v534, %v530
    %v635 = vpack.c.b16 %v539, %v535
    %v636 = vpack.c.b16 %v540, %v536
    %v637 = vpack.c.b16 %v541, %v537
    %v638 = vpack.c.b16 %v542, %v538
    %v639 = vpack.c.b16 %v547, %v543
    %v640 = vpack.c.b16 %v548, %v544
    %v641 = vpack.c.b16 %v549, %v545
    %v642 = vpack.c.b16 %v550, %v546
    %v643 = vpack.c.b16 %v555, %v551
    %v644 = vpack.c.b16 %v556, %v552
    %v645 = vpack.c.b16 %v557, %v553
    %v646 = vpack.c.b16 %v558, %v554
    %v647 = vpack.c.b16 %v563, %v559
    %v648 = vpack.c.b16 %v564, %v560
    %v649 = vpack.c.b16 %v565, %v561
    %v650 = vpack.c.b16 %v566, %v562
    %v651 = vpack.c.b16 %v571, %v567
    %v652 = vpack.c.b16 %v572, %v568
    %v653 = vpack.c.b16 %v573, %v569
    %v654 = vpack.c.b16 %v574, %v570
    %v655 = vpack.c.b16 %v579, %v575
    %v656 = vpack.c.b16 %v580, %v576
    %v657 = vpack.c.b16 %v581, %v577
    %v658 = vpack.c.b16 %v582, %v578
    %v659 = vpack.c.b16 %v587, %v583
    %v660 = vpack.c.b16 %v588, %v584
    %v661 = vpack.c.b16 %v589, %v585
    %v662 = vpack.c.b16 %v590, %v586
    %v663 = vpack.c.b16 %v595, %v591
    %v664 = vpack.c.b16 %v596, %v592
    %v665 = vpack.c.b16 %v597, %v593
    %v666 = vpack.c.b16 %v598, %v594
    %v667 = vpack.c.b16 %v603, %v599
    %v668 = vpack.c.b16 %v604, %v600
    %v669 = vpack.c.b16 %v605, %v601
    %v670 = vpack.c.b16 %v606, %v602
    %735 = vmatpush.bf16.msra.mxu0 %v635
    %736 = vmatpush.bf16.msra.mxu0 %v631
    %737 = vmatpush.bf16.msra.mxu0 %v627
    %738 = vmatpush.bf16.msra.mxu0 %v623
    %739 = vmatpush.bf16.msra.mxu0 %v619
    %740 = vmatpush.bf16.msra.mxu0 %v615
    %741 = vmatpush.bf16.msra.mxu0 %v611
    %742 = vmatpush.bf16.msra.mxu0 %v607
    %743 = vmatmul.bf16.gmra.mxu0 %v349
    %v744 = vpop.f32.mrf.mxu0
    %v745 = vadd.f32 0.0, %v744
    %v746 = vpop.f32.mrf.mxu0
    %747 = vdwg.mxu0
    %748 = vmatpush.bf16.msra.mxu0 %v667
    %749 = vmatpush.bf16.msra.mxu0 %v663
    %750 = vmatpush.bf16.msra.mxu0 %v659
    %751 = vmatpush.bf16.msra.mxu0 %v655
    %752 = vmatpush.bf16.msra.mxu0 %v651
    %753 = vmatpush.bf16.msra.mxu0 %v647
    %754 = vmatpush.bf16.msra.mxu0 %v643
    %755 = vmatpush.bf16.msra.mxu0 %v639
    %756 = vmatmul.bf16.gmra.mxu0 %v350
    %v757 = vpop.f32.mrf.mxu0
    %v758 = vadd.f32 %v745, %v757
    %v759 = vpop.f32.mrf.mxu0
    %760 = vdwg.mxu0
    %761 = vmatpush.bf16.msra.mxu0 %v636
    %762 = vmatpush.bf16.msra.mxu0 %v632
    %763 = vmatpush.bf16.msra.mxu0 %v628
    %764 = vmatpush.bf16.msra.mxu0 %v624
    %765 = vmatpush.bf16.msra.mxu0 %v620
    %766 = vmatpush.bf16.msra.mxu0 %v616
    %767 = vmatpush.bf16.msra.mxu0 %v612
    %768 = vmatpush.bf16.msra.mxu0 %v608
    %769 = vmatmul.bf16.gmra.mxu0 %v349
    %v770 = vpop.f32.mrf.mxu0
    %v771 = vadd.f32 0.0, %v770
    %v772 = vpop.f32.mrf.mxu0
    %773 = vdwg.mxu0
    %774 = vmatpush.bf16.msra.mxu0 %v668
    %775 = vmatpush.bf16.msra.mxu0 %v664
    %776 = vmatpush.bf16.msra.mxu0 %v660
    %777 = vmatpush.bf16.msra.mxu0 %v656
    %778 = vmatpush.bf16.msra.mxu0 %v652
    %779 = vmatpush.bf16.msra.mxu0 %v648
    %780 = vmatpush.bf16.msra.mxu0 %v644
    %781 = vmatpush.bf16.msra.mxu0 %v640
    %782 = vmatmul.bf16.gmra.mxu0 %v350
    %v783 = vpop.f32.mrf.mxu0
    %v784 = vadd.f32 %v771, %v783
    %v785 = vpop.f32.mrf.mxu0
    %786 = vdwg.mxu0
    %787 = vmatpush.bf16.msra.mxu0 %v637
    %788 = vmatpush.bf16.msra.mxu0 %v633
    %789 = vmatpush.bf16.msra.mxu0 %v629
    %790 = vmatpush.bf16.msra.mxu0 %v625
    %791 = vmatpush.bf16.msra.mxu0 %v621
    %792 = vmatpush.bf16.msra.mxu0 %v617
    %793 = vmatpush.bf16.msra.mxu0 %v613
    %794 = vmatpush.bf16.msra.mxu0 %v609
    %795 = vmatmul.bf16.gmra.mxu0 %v349
    %v796 = vpop.f32.mrf.mxu0
    %v797 = vadd.f32 0.0, %v796
    %v798 = vpop.f32.mrf.mxu0
    %799 = vdwg.mxu0
    %800 = vmatpush.bf16.msra.mxu0 %v669
    %801 = vmatpush.bf16.msra.mxu0 %v665
    %802 = vmatpush.bf16.msra.mxu0 %v661
    %803 = vmatpush.bf16.msra.mxu0 %v657
    %804 = vmatpush.bf16.msra.mxu0 %v653
    %805 = vmatpush.bf16.msra.mxu0 %v649
    %806 = vmatpush.bf16.msra.mxu0 %v645
    %807 = vmatpush.bf16.msra.mxu0 %v641
    %808 = vmatmul.bf16.gmra.mxu0 %v350
    %v809 = vpop.f32.mrf.mxu0
    %v810 = vadd.f32 %v797, %v809
    %v811 = vpop.f32.mrf.mxu0
    %812 = vdwg.mxu0
    %813 = vmatpush.bf16.msra.mxu0 %v638
    %814 = vmatpush.bf16.msra.mxu0 %v634
    %815 = vmatpush.bf16.msra.mxu0 %v630
    %816 = vmatpush.bf16.msra.mxu0 %v626
    %817 = vmatpush.bf16.msra.mxu0 %v622
    %818 = vmatpush.bf16.msra.mxu0 %v618
    %819 = vmatpush.bf16.msra.mxu0 %v614
    %820 = vmatpush.bf16.msra.mxu0 %v610
    %821 = vmatmul.bf16.gmra.mxu0 %v349
    %v822 = vpop.f32.mrf.mxu0
    %v823 = vadd.f32 0.0, %v822
    %v824 = vpop.f32.mrf.mxu0
    %825 = vdwg.mxu0
    %826 = vmatpush.bf16.msra.mxu0 %v670
    %827 = vmatpush.bf16.msra.mxu0 %v666
    %828 = vmatpush.bf16.msra.mxu0 %v662
    %829 = vmatpush.bf16.msra.mxu0 %v658
    %830 = vmatpush.bf16.msra.mxu0 %v654
    %831 = vmatpush.bf16.msra.mxu0 %v650
    %832 = vmatpush.bf16.msra.mxu0 %v646
    %833 = vmatpush.bf16.msra.mxu0 %v642
    %834 = vmatmul.bf16.gmra.mxu0 %v350
    %v835 = vpop.f32.mrf.mxu0
    %v836 = vadd.f32 %v823, %v835
    %v837 = vpop.f32.mrf.mxu0
    %838 = vdwg.mxu0
    %v839 = vpack.c.bf16 %v784, %v758
    %v840 = vpack.c.bf16 %v836, %v810
    %v841 = vld [vmem:[#allocation8] sm:$0xf]
    %843 = vst [vmem:[#allocation1] ss:$9 sm:$0xff] %v841
    %v844 = vld [vmem:[#allocation1] sm:$0xff]
    %v845 = vld [vmem:[#allocation1 + $0x9] sm:$0xff]
    %v846 = vld [vmem:[#allocation1 + $0x12] sm:$0xff]
    %v847 = vld [vmem:[#allocation1 + $0x1b] sm:$0xff]
    %v848 = vpack.i.b16 %v844, %v844
    %v850 = vperm.slane %v848, 0
    %v851 = vpack.i.b16 %v845, %v845
    %v853 = vperm.slane %v851, 0
    %v854 = vpack.i.b16 %v846, %v846
    %v856 = vperm.slane %v854, 0
    %v857 = vpack.i.b16 %v847, %v847
    %v859 = vperm.slane %v857, 0
    %v860 = vunpack.c.l.bf16 %v839
    %v861 = vunpack.c.h.bf16 %v839
    %v862 = vunpack.c.l.bf16 %v840
    %v863 = vunpack.c.h.bf16 %v840
    %v864 = vunpack.c.l.bf16 %v850
    %v865 = vunpack.c.l.bf16 %v853
    %v866 = vunpack.c.l.bf16 %v856
    %v867 = vunpack.c.l.bf16 %v859
    %v868 = vadd.f32 %v860, %v864
    %v869 = vadd.f32 %v861, %v865
    %v870 = vadd.f32 %v862, %v866
    %v871 = vadd.f32 %v863, %v867
    %v872 = vpack.c.bf16 %v869, %v868
    %v873 = vpack.c.bf16 %v871, %v870
    %v874 = vunpack.c.l.bf16 %v872
    %v875 = vunpack.c.h.bf16 %v872
    %v876 = vunpack.c.l.bf16 %v873
    %v877 = vunpack.c.h.bf16 %v873
    %v878 = vmax.f32 %v874, 0.0
    %v879 = vmax.f32 %v875, 0.0
    %v880 = vmax.f32 %v876, 0.0
    %v881 = vmax.f32 %v877, 0.0
    %v882 = vpack.c.bf16 %v878, %v878
    %v883 = vpack.c.bf16 %v879, %v879
    %v884 = vpack.c.bf16 %v880, %v880
    %v885 = vpack.c.bf16 %v881, %v881
    %v886 = vld [vmem:[#allocation10] sm:$0xf]
    %v887 = vld [vmem:[#allocation10 + $0x4] sm:$0xf]
    %v888 = vld [vmem:[#allocation10 + $0x8] sm:$0xf]
    %v889 = vld [vmem:[#allocation10 + $0xc] sm:$0xf]
    %v890 = vld [vmem:[#allocation10 + $0x10] sm:$0xf]
    %v891 = vld [vmem:[#allocation10 + $0x14] sm:$0xf]
    %v892 = vld [vmem:[#allocation10 + $0x18] sm:$0xf]
    %v893 = vld [vmem:[#allocation10 + $0x1c] sm:$0xf]
    %v894 = vld [vmem:[#allocation10 + $0x20] sm:$0xf]
    %v895 = vld [vmem:[#allocation10 + $0x24] sm:$0xf]
    %v896 = vld [vmem:[#allocation10 + $0x28] sm:$0xf]
    %v897 = vld [vmem:[#allocation10 + $0x2c] sm:$0xf]
    %v898 = vld [vmem:[#allocation10 + $0x30] sm:$0xf]
    %v899 = vld [vmem:[#allocation10 + $0x34] sm:$0xf]
    %v900 = vld [vmem:[#allocation10 + $0x38] sm:$0xf]
    %v901 = vld [vmem:[#allocation10 + $0x3c] sm:$0xf]
    %v902 = vld [vmem:[#allocation10 + $0x40] sm:$0xf]
    %v903 = vld [vmem:[#allocation10 + $0x44] sm:$0xf]
    %v904 = vld [vmem:[#allocation10 + $0x48] sm:$0xf]
    %v905 = vld [vmem:[#allocation10 + $0x4c] sm:$0xf]
    %v906 = vld [vmem:[#allocation10 + $0x50] sm:$0xf]
    %v907 = vld [vmem:[#allocation10 + $0x54] sm:$0xf]
    %v908 = vld [vmem:[#allocation10 + $0x58] sm:$0xf]
    %v909 = vld [vmem:[#allocation10 + $0x5c] sm:$0xf]
    %v910 = vld [vmem:[#allocation10 + $0x60] sm:$0xf]
    %v911 = vld [vmem:[#allocation10 + $0x64] sm:$0xf]
    %v912 = vld [vmem:[#allocation10 + $0x68] sm:$0xf]
    %v913 = vld [vmem:[#allocation10 + $0x6c] sm:$0xf]
    %v914 = vld [vmem:[#allocation10 + $0x70] sm:$0xf]
    %v915 = vld [vmem:[#allocation10 + $0x74] sm:$0xf]
    %v916 = vld [vmem:[#allocation10 + $0x78] sm:$0xf]
    %v917 = vld [vmem:[#allocation10 + $0x7c] sm:$0xf]
    %v918 = vld [vmem:[#allocation10 + $0x80] sm:$0xf]
    %v919 = vld [vmem:[#allocation10 + $0x84] sm:$0xf]
    %v920 = vld [vmem:[#allocation10 + $0x88] sm:$0xf]
    %v921 = vld [vmem:[#allocation10 + $0x8c] sm:$0xf]
    %v922 = vld [vmem:[#allocation10 + $0x90] sm:$0xf]
    %v923 = vld [vmem:[#allocation10 + $0x94] sm:$0xf]
    %v924 = vld [vmem:[#allocation10 + $0x98] sm:$0xf]
    %v925 = vld [vmem:[#allocation10 + $0x9c] sm:$0xf]
    %v926 = vld [vmem:[#allocation10 + $0xa0] sm:$0xf]
    %v927 = vld [vmem:[#allocation10 + $0xa4] sm:$0xf]
    %v928 = vld [vmem:[#allocation10 + $0xa8] sm:$0xf]
    %v929 = vld [vmem:[#allocation10 + $0xac] sm:$0xf]
    %v930 = vld [vmem:[#allocation10 + $0xb0] sm:$0xf]
    %v931 = vld [vmem:[#allocation10 + $0xb4] sm:$0xf]
    %v932 = vld [vmem:[#allocation10 + $0xb8] sm:$0xf]
    %v933 = vld [vmem:[#allocation10 + $0xbc] sm:$0xf]
    %v934 = vld [vmem:[#allocation10 + $0xc0] sm:$0xf]
    %v935 = vld [vmem:[#allocation10 + $0xc4] sm:$0xf]
    %v936 = vld [vmem:[#allocation10 + $0xc8] sm:$0xf]
    %v937 = vld [vmem:[#allocation10 + $0xcc] sm:$0xf]
    %v938 = vld [vmem:[#allocation10 + $0xd0] sm:$0xf]
    %v939 = vld [vmem:[#allocation10 + $0xd4] sm:$0xf]
    %v940 = vld [vmem:[#allocation10 + $0xd8] sm:$0xf]
    %v941 = vld [vmem:[#allocation10 + $0xdc] sm:$0xf]
    %v942 = vld [vmem:[#allocation10 + $0xe0] sm:$0xf]
    %v943 = vld [vmem:[#allocation10 + $0xe4] sm:$0xf]
    %v944 = vld [vmem:[#allocation10 + $0xe8] sm:$0xf]
    %v945 = vld [vmem:[#allocation10 + $0xec] sm:$0xf]
    %v946 = vld [vmem:[#allocation10 + $0xf0] sm:$0xf]
    %v947 = vld [vmem:[#allocation10 + $0xf4] sm:$0xf]
    %v948 = vld [vmem:[#allocation10 + $0xf8] sm:$0xf]
    %v949 = vld [vmem:[#allocation10 + $0xfc] sm:$0xf]
    %v1014 = vunpack.c.l.b16 %v886
    %v1015 = vunpack.c.l.b16 %v887
    %v1016 = vunpack.c.l.b16 %v888
    %v1017 = vunpack.c.l.b16 %v889
    %v1018 = vunpack.c.l.b16 %v890
    %v1019 = vunpack.c.l.b16 %v891
    %v1020 = vunpack.c.l.b16 %v892
    %v1021 = vunpack.c.l.b16 %v893
    %v1022 = vunpack.c.l.b16 %v894
    %v1023 = vunpack.c.l.b16 %v895
    %v1024 = vunpack.c.l.b16 %v896
    %v1025 = vunpack.c.l.b16 %v897
    %v1026 = vunpack.c.l.b16 %v898
    %v1027 = vunpack.c.l.b16 %v899
    %v1028 = vunpack.c.l.b16 %v900
    %v1029 = vunpack.c.l.b16 %v901
    %v1030 = vunpack.c.l.b16 %v902
    %v1031 = vunpack.c.l.b16 %v903
    %v1032 = vunpack.c.l.b16 %v904
    %v1033 = vunpack.c.l.b16 %v905
    %v1034 = vunpack.c.l.b16 %v906
    %v1035 = vunpack.c.l.b16 %v907
    %v1036 = vunpack.c.l.b16 %v908
    %v1037 = vunpack.c.l.b16 %v909
    %v1038 = vunpack.c.l.b16 %v910
    %v1039 = vunpack.c.l.b16 %v911
    %v1040 = vunpack.c.l.b16 %v912
    %v1041 = vunpack.c.l.b16 %v913
    %v1042 = vunpack.c.l.b16 %v914
    %v1043 = vunpack.c.l.b16 %v915
    %v1044 = vunpack.c.l.b16 %v916
    %v1045 = vunpack.c.l.b16 %v917
    %v1046 = vunpack.c.l.b16 %v918
    %v1047 = vunpack.c.l.b16 %v919
    %v1048 = vunpack.c.l.b16 %v920
    %v1049 = vunpack.c.l.b16 %v921
    %v1050 = vunpack.c.l.b16 %v922
    %v1051 = vunpack.c.l.b16 %v923
    %v1052 = vunpack.c.l.b16 %v924
    %v1053 = vunpack.c.l.b16 %v925
    %v1054 = vunpack.c.l.b16 %v926
    %v1055 = vunpack.c.l.b16 %v927
    %v1056 = vunpack.c.l.b16 %v928
    %v1057 = vunpack.c.l.b16 %v929
    %v1058 = vunpack.c.l.b16 %v930
    %v1059 = vunpack.c.l.b16 %v931
    %v1060 = vunpack.c.l.b16 %v932
    %v1061 = vunpack.c.l.b16 %v933
    %v1062 = vunpack.c.l.b16 %v934
    %v1063 = vunpack.c.l.b16 %v935
    %v1064 = vunpack.c.l.b16 %v936
    %v1065 = vunpack.c.l.b16 %v937
    %v1066 = vunpack.c.l.b16 %v938
    %v1067 = vunpack.c.l.b16 %v939
    %v1068 = vunpack.c.l.b16 %v940
    %v1069 = vunpack.c.l.b16 %v941
    %v1070 = vunpack.c.l.b16 %v942
    %v1071 = vunpack.c.l.b16 %v943
    %v1072 = vunpack.c.l.b16 %v944
    %v1073 = vunpack.c.l.b16 %v945
    %v1074 = vunpack.c.l.b16 %v946
    %v1075 = vunpack.c.l.b16 %v947
    %v1076 = vunpack.c.l.b16 %v948
    %v1077 = vunpack.c.l.b16 %v949
    %v1078 = vpack.c.b16 %v1015, %v1014
    %v1079 = vpack.c.b16 %v1017, %v1016
    %v1080 = vpack.c.b16 %v1019, %v1018
    %v1081 = vpack.c.b16 %v1021, %v1020
    %v1082 = vpack.c.b16 %v1023, %v1022
    %v1083 = vpack.c.b16 %v1025, %v1024
    %v1084 = vpack.c.b16 %v1027, %v1026
    %v1085 = vpack.c.b16 %v1029, %v1028
    %v1086 = vpack.c.b16 %v1031, %v1030
    %v1087 = vpack.c.b16 %v1033, %v1032
    %v1088 = vpack.c.b16 %v1035, %v1034
    %v1089 = vpack.c.b16 %v1037, %v1036
    %v1090 = vpack.c.b16 %v1039, %v1038
    %v1091 = vpack.c.b16 %v1041, %v1040
    %v1092 = vpack.c.b16 %v1043, %v1042
    %v1093 = vpack.c.b16 %v1045, %v1044
    %v1094 = vpack.c.b16 %v1047, %v1046
    %v1095 = vpack.c.b16 %v1049, %v1048
    %v1096 = vpack.c.b16 %v1051, %v1050
    %v1097 = vpack.c.b16 %v1053, %v1052
    %v1098 = vpack.c.b16 %v1055, %v1054
    %v1099 = vpack.c.b16 %v1057, %v1056
    %v1100 = vpack.c.b16 %v1059, %v1058
    %v1101 = vpack.c.b16 %v1061, %v1060
    %v1102 = vpack.c.b16 %v1063, %v1062
    %v1103 = vpack.c.b16 %v1065, %v1064
    %v1104 = vpack.c.b16 %v1067, %v1066
    %v1105 = vpack.c.b16 %v1069, %v1068
    %v1106 = vpack.c.b16 %v1071, %v1070
    %v1107 = vpack.c.b16 %v1073, %v1072
    %v1108 = vpack.c.b16 %v1075, %v1074
    %v1109 = vpack.c.b16 %v1077, %v1076
    %1142 = vmatpush.bf16.msra.mxu0 %v1085
    %1143 = vmatpush.bf16.msra.mxu0 %v1084
    %1144 = vmatpush.bf16.msra.mxu0 %v1083
    %1145 = vmatpush.bf16.msra.mxu0 %v1082
    %1146 = vmatpush.bf16.msra.mxu0 %v1081
    %1147 = vmatpush.bf16.msra.mxu0 %v1080
    %1148 = vmatpush.bf16.msra.mxu0 %v1079
    %1149 = vmatpush.bf16.msra.mxu0 %v1078
    %1150 = vmatmul.bf16.gmra.mxu0 %v882
    %v1151 = vpop.f32.mrf.mxu0
    %v1152 = vadd.f32 0.0, %v1151
    %v1153 = vpop.f32.mrf.mxu0
    %1154 = vdwg.mxu0
    %1155 = vmatpush.bf16.msra.mxu0 %v1093
    %1156 = vmatpush.bf16.msra.mxu0 %v1092
    %1157 = vmatpush.bf16.msra.mxu0 %v1091
    %1158 = vmatpush.bf16.msra.mxu0 %v1090
    %1159 = vmatpush.bf16.msra.mxu0 %v1089
    %1160 = vmatpush.bf16.msra.mxu0 %v1088
    %1161 = vmatpush.bf16.msra.mxu0 %v1087
    %1162 = vmatpush.bf16.msra.mxu0 %v1086
    %1163 = vmatmul.bf16.gmra.mxu0 %v883
    %v1164 = vpop.f32.mrf.mxu0
    %v1165 = vadd.f32 %v1152, %v1164
    %v1166 = vpop.f32.mrf.mxu0
    %1167 = vdwg.mxu0
    %1168 = vmatpush.bf16.msra.mxu0 %v1101
    %1169 = vmatpush.bf16.msra.mxu0 %v1100
    %1170 = vmatpush.bf16.msra.mxu0 %v1099
    %1171 = vmatpush.bf16.msra.mxu0 %v1098
    %1172 = vmatpush.bf16.msra.mxu0 %v1097
    %1173 = vmatpush.bf16.msra.mxu0 %v1096
    %1174 = vmatpush.bf16.msra.mxu0 %v1095
    %1175 = vmatpush.bf16.msra.mxu0 %v1094
    %1176 = vmatmul.bf16.gmra.mxu0 %v884
    %v1177 = vpop.f32.mrf.mxu0
    %v1178 = vadd.f32 %v1165, %v1177
    %v1179 = vpop.f32.mrf.mxu0
    %1180 = vdwg.mxu0
    %1181 = vmatpush.bf16.msra.mxu0 %v1109
    %1182 = vmatpush.bf16.msra.mxu0 %v1108
    %1183 = vmatpush.bf16.msra.mxu0 %v1107
    %1184 = vmatpush.bf16.msra.mxu0 %v1106
    %1185 = vmatpush.bf16.msra.mxu0 %v1105
    %1186 = vmatpush.bf16.msra.mxu0 %v1104
    %1187 = vmatpush.bf16.msra.mxu0 %v1103
    %1188 = vmatpush.bf16.msra.mxu0 %v1102
    %1189 = vmatmul.bf16.gmra.mxu0 %v885
    %v1190 = vpop.f32.mrf.mxu0
    %v1191 = vadd.f32 %v1178, %v1190
    %v1192 = vpop.f32.mrf.mxu0
    %1193 = vdwg.mxu0
    %v1194 = vpack.c.bf16 %v1191, %v1191
    %v1195 = vld [vmem:[#allocation11] sm:$0x1]
    %v1197 = vpack.i.b16 %v1195, %v1195
    %v1199 = vperm.slane %v1197, 0
    %v1200 = vunpack.c.l.bf16 %v1194
    %v1201 = vunpack.c.l.bf16 %v1199
    %v1202 = vadd.f32 %v1200, %v1201
    %v1203 = vpack.c.bf16 %v1202, %v1202
    %v1204 = vunpack.c.l.bf16 %v1203
    %v1205 = vmax.f32 %v1204, 0.0
    %v1206 = vpack.c.bf16 %v1205, %v1205
    %v1207 = vld [vmem:[%s9] sm:$0xf]
    %v1208 = vld [vmem:[%s9 + $0x4] sm:$0xf]
    %v1209 = vld [vmem:[%s9 + $0x8] sm:$0xf]
    %v1210 = vld [vmem:[%s9 + $0xc] sm:$0xf]
    %v1211 = vld [vmem:[%s9 + $0x10] sm:$0xf]
    %v1212 = vld [vmem:[%s9 + $0x14] sm:$0xf]
    %v1213 = vld [vmem:[%s9 + $0x18] sm:$0xf]
    %v1214 = vld [vmem:[%s9 + $0x1c] sm:$0xf]
    %v1215 = vld [vmem:[%s9 + $0x20] sm:$0xf]
    %v1216 = vld [vmem:[%s9 + $0x24] sm:$0xf]
    %v1217 = vld [vmem:[%s9 + $0x28] sm:$0xf]
    %v1218 = vld [vmem:[%s9 + $0x2c] sm:$0xf]
    %v1219 = vld [vmem:[%s9 + $0x30] sm:$0xf]
    %v1220 = vld [vmem:[%s9 + $0x34] sm:$0xf]
    %v1221 = vld [vmem:[%s9 + $0x38] sm:$0xf]
    %v1222 = vld [vmem:[%s9 + $0x3c] sm:$0xf]
    %v1239 = vunpack.c.l.b16 %v1207
    %v1240 = vunpack.c.l.b16 %v1208
    %v1241 = vunpack.c.l.b16 %v1209
    %v1242 = vunpack.c.l.b16 %v1210
    %v1243 = vunpack.c.l.b16 %v1211
    %v1244 = vunpack.c.l.b16 %v1212
    %v1245 = vunpack.c.l.b16 %v1213
    %v1246 = vunpack.c.l.b16 %v1214
    %v1247 = vunpack.c.l.b16 %v1215
    %v1248 = vunpack.c.l.b16 %v1216
    %v1249 = vunpack.c.l.b16 %v1217
    %v1250 = vunpack.c.l.b16 %v1218
    %v1251 = vunpack.c.l.b16 %v1219
    %v1252 = vunpack.c.l.b16 %v1220
    %v1253 = vunpack.c.l.b16 %v1221
    %v1254 = vunpack.c.l.b16 %v1222
    %v1255 = vpack.c.b16 %v1240, %v1239
    %v1256 = vpack.c.b16 %v1242, %v1241
    %v1257 = vpack.c.b16 %v1244, %v1243
    %v1258 = vpack.c.b16 %v1246, %v1245
    %v1259 = vpack.c.b16 %v1248, %v1247
    %v1260 = vpack.c.b16 %v1250, %v1249
    %v1261 = vpack.c.b16 %v1252, %v1251
    %v1262 = vpack.c.b16 %v1254, %v1253
    %1271 = vmatpush.bf16.msra.mxu0 %v1262
    %1272 = vmatpush.bf16.msra.mxu0 %v1261
    %1273 = vmatpush.bf16.msra.mxu0 %v1260
    %1274 = vmatpush.bf16.msra.mxu0 %v1259
    %1275 = vmatpush.bf16.msra.mxu0 %v1258
    %1276 = vmatpush.bf16.msra.mxu0 %v1257
    %1277 = vmatpush.bf16.msra.mxu0 %v1256
    %1278 = vmatpush.bf16.msra.mxu0 %v1255
    %1279 = vmatmul.bf16.gmra.mxu0 %v1206
    %v1280 = vpop.f32.mrf.mxu0
    %v1281 = vadd.f32 0.0, %v1280
    %v1282 = vpop.f32.mrf.mxu0
    %1283 = vdwg.mxu0
    %v1284 = vpack.c.bf16 %v1281, %v1281
    %v1285 = vld [vmem:[#allocation13] sm:$0x1]
    %v1287 = vpack.i.b16 %v1285, %v1285
    %v1289 = vperm.slane %v1287, 0
    %v1290 = vunpack.c.l.bf16 %v1284
    %v1291 = vunpack.c.l.bf16 %v1289
    %v1292 = vadd.f32 %v1290, %v1291
    %v1293 = vpack.c.bf16 %v1292, %v1292
    %v1294 = vunpack.c.l.bf16 %v1293
    %v1295 = vmax.f32 %v1294, 0.0
    %v1296 = vpack.c.bf16 %v1295, %v1295
    %v1297 = vld [vmem:[%s11] sm:$0xf]
    %v1298 = vld [vmem:[%s11 + $0x4] sm:$0xf]
    %v1299 = vld [vmem:[%s11 + $0x8] sm:$0xf]
    %v1300 = vld [vmem:[%s11 + $0xc] sm:$0xf]
    %v1301 = vld [vmem:[%s11 + $0x10] sm:$0xf]
    %v1302 = vld [vmem:[%s11 + $0x14] sm:$0xf]
    %v1303 = vld [vmem:[%s11 + $0x18] sm:$0xf]
    %v1304 = vld [vmem:[%s11 + $0x1c] sm:$0xf]
    %v1305 = vld [vmem:[%s11 + $0x20] sm:$0xf]
    %v1306 = vld [vmem:[%s11 + $0x24] sm:$0xf]
    %v1307 = vld [vmem:[%s11 + $0x28] sm:$0xf]
    %v1308 = vld [vmem:[%s11 + $0x2c] sm:$0xf]
    %v1309 = vld [vmem:[%s11 + $0x30] sm:$0xf]
    %v1310 = vld [vmem:[%s11 + $0x34] sm:$0xf]
    %v1311 = vld [vmem:[%s11 + $0x38] sm:$0xf]
    %v1312 = vld [vmem:[%s11 + $0x3c] sm:$0xf]
    %v1313 = vld [vmem:[#allocation14] sm:$0x1]
    %v1314 = vunpack.c.l.bf16 %v1313
    %v1315 = vperm.slane %v1314, 0
    %v1332 = vunpack.c.l.b16 %v1297
    %v1333 = vunpack.c.l.b16 %v1298
    %v1334 = vunpack.c.l.b16 %v1299
    %v1335 = vunpack.c.l.b16 %v1300
    %v1336 = vunpack.c.l.b16 %v1301
    %v1337 = vunpack.c.l.b16 %v1302
    %v1338 = vunpack.c.l.b16 %v1303
    %v1339 = vunpack.c.l.b16 %v1304
    %v1340 = vunpack.c.l.b16 %v1305
    %v1341 = vunpack.c.l.b16 %v1306
    %v1342 = vunpack.c.l.b16 %v1307
    %v1343 = vunpack.c.l.b16 %v1308
    %v1344 = vunpack.c.l.b16 %v1309
    %v1345 = vunpack.c.l.b16 %v1310
    %v1346 = vunpack.c.l.b16 %v1311
    %v1347 = vunpack.c.l.b16 %v1312
    %v1348 = vpack.c.b16 %v1333, %v1332
    %v1349 = vpack.c.b16 %v1335, %v1334
    %v1350 = vpack.c.b16 %v1337, %v1336
    %v1351 = vpack.c.b16 %v1339, %v1338
    %v1352 = vpack.c.b16 %v1341, %v1340
    %v1353 = vpack.c.b16 %v1343, %v1342
    %v1354 = vpack.c.b16 %v1345, %v1344
    %v1355 = vpack.c.b16 %v1347, %v1346
    %1364 = vmatpush.bf16.msra.mxu0 %v1355
    %1365 = vmatpush.bf16.msra.mxu0 %v1354
    %1366 = vmatpush.bf16.msra.mxu0 %v1353
    %1367 = vmatpush.bf16.msra.mxu0 %v1352
    %1368 = vmatpush.bf16.msra.mxu0 %v1351
    %1369 = vmatpush.bf16.msra.mxu0 %v1350
    %1370 = vmatpush.bf16.msra.mxu0 %v1349
    %1371 = vmatpush.bf16.msra.mxu0 %v1348
    %1372 = vmatmul.bf16.gmra.mxu0 %v1296
    %v1373 = vpop.f32.mrf.mxu0
    %v1374 = vadd.f32 %v1315, %v1373
    %v1375 = vpop.f32.mrf.mxu0
    %1376 = vdwg.mxu0
    %vm1377 = vcmask 60416
    %1378 = vst.msk [vmem:[#allocation16] sm:$0xf] %vm1377, %v1374
    // Predicated region
    $region86: #{video_audio_forward.1} parent=1 // pred_check
      _
    $region87: #{video_audio_forward.1} parent=1 // pred_check_branch
      %1380 = sbr.rel (0) target = $region89
    $region88: #{video_audio_forward.1} parent=1 // pred_region
      %1382 = vsyncadd [#allocation4], 0
      %s1384 = sshll.u32 [#allocation16], 4
      %s1385 = int_to_ptr.vmem [resolvable:$true] %s1384
      %s1386 = sshll.u32 %s13, 4
      %s1387 = int_to_ptr.hbm [resolvable:$true] %s1386
      %1389 = dma.vmem_to_hbm [thread:$0]  %s1385, 64, %s1387, [#allocation4]
    $region89: #{video_audio_forward.1} parent=1 // pred_fallthru
      _
    // Predicated region
    $region90: #{video_audio_forward.1} parent=1 // pred_check
      _
    $region91: #{video_audio_forward.1} parent=1 // pred_check_branch
      %1391 = sbr.rel (0) target = $region93
    $region92: #{video_audio_forward.1} parent=1 // pred_region
      %1393 = dma.done [#allocation4], 64
    $region93: #{video_audio_forward.1} parent=1 // pred_fallthru
      _
    %1394 = vsyncpa [#allocation3], 1
    %1395 = vsyncpa [#allocation6], 1
    %1396 = vsyncpa [#allocation9], 1
    %1397 = vsyncpa [#allocation12], 1
    %1398 = vsyncpa [#allocation15], 1
    %1399 = vsyncpa [#allocation4], 1

</llo_original>
